<compile_context>
chip_gen: v7x
topology: tpu7x:2x2x1
jax: 0.10.0
libtpu: 0.0.40
codegen_flags: <defaults>
</compile_context>

<pallas_src>
import functools

import jax
import jax.numpy as jnp
from jax.experimental import pallas as pl
from jax.experimental.pallas import tpu as pltpu


def _head_kernel(x_ref, w_ref, b_ref, o_ref, *, inv_hw):
    # x_ref: (TB, HW, C) f32 -- channels-last features, C lane-dense
    # w_ref: (C, OUT)    f32 -- Linear weight, transposed once host-side
    # b_ref: (1, OUT)    f32
    # o_ref: (TB, OUT)   f32
    # Sublane-direction sum over HW; (TB, C) lands lane-dense for the MXU.
    # The 1/HW mean scale is folded into the tiny (TB, OUT) result.
    pooled = jnp.sum(x_ref[...], axis=1)                           # (TB, C)
    o_ref[...] = (
        jnp.dot(pooled, w_ref[...], preferred_element_type=jnp.float32) * inv_hw
        + b_ref[...]
    )


def _choose_batch_tile(B, HW, C, *, cap=64, x_budget_bytes=24 << 20):
    """Pick a batch tile: big (HBM-bound kernel), sublane-aligned, VMEM-safe."""
    hw_pad = ((HW + 7) // 8) * 8            # HW pads to a multiple of 8 sublanes
    row_bytes = 2 * hw_pad * C * 4          # double-buffered f32 bytes per batch row
    if B < 8:
        return B, hw_pad
    tb = min(cap, max(1, x_budget_bytes // row_bytes), B)
    tb = max(8, (tb // 8) * 8)              # full f32 sublanes
    # Keep >= 2 grid steps when the batch allows it so v7x's two TensorCores
    # both stream HBM (the "parallel" batch axis shards the grid).
    if B >= 16 and pl.cdiv(B, tb) < 2:
        tb = max(8, ((B // 2) // 8) * 8)
    return tb, hw_pad


def net_forward(x_nchw, weight, bias):
    """Head of Net: global-avg-pool + flatten + Linear(2048, 25).

    x_nchw: (B, 2048, H, W) f32 backbone feature map (as PyTorch hands it).
    weight: (25, 2048) f32; bias: (25,) f32.
    """
    B, C, H, W = x_nchw.shape
    OUT = weight.shape[0]
    HW = H * W

    # Channels-last for the kernel: C=2048 on lanes, HW on sublanes.
    # TODO(synk): if the backbone can emit NHWC directly, drop this transpose.
    x = jnp.transpose(x_nchw.reshape(B, C, HW), (0, 2, 1))   # (B, HW, C)
    w_t = weight.T                                           # (C, OUT)
    b = bias.reshape(1, OUT)

    tb, hw_pad = _choose_batch_tile(B, HW, C)
    grid = (pl.cdiv(B, tb),)

    # Explicit VMEM budget: double-buffered x tile + lane-padded (C,128) weight
    # (x2 buffers) + slack.  Sized to stay under v7x's ~32 MiB scoped default
    # while comfortably exceeding v5e's 16 MiB default when tb is large.
    vmem_limit = 2 * tb * hw_pad * C * 4 + 2 * C * 128 * 4 + (4 << 20)
    vmem_limit = max(int(vmem_limit), 16 << 20)

    kernel = functools.partial(_head_kernel, inv_hw=1.0 / float(HW))

    cost = pl.CostEstimate(
        flops=2 * B * C * OUT + B * C * HW,
        transcendentals=0,
        bytes_accessed=x.size * 4 + w_t.size * 4 + b.size * 4 + B * OUT * 4,
    )

    return pl.pallas_call(
        kernel,
        out_shape=jax.ShapeDtypeStruct((B, OUT), jnp.float32),
        grid_spec=pl.GridSpec(
            grid=grid,
            in_specs=[
                pl.BlockSpec((tb, HW, C), lambda i: (i, 0, 0)),
                pl.BlockSpec((C, OUT), lambda i: (0, 0)),   # VMEM-resident across grid
                pl.BlockSpec((1, OUT), lambda i: (0, 0)),   # VMEM-resident across grid
            ],
            out_specs=pl.BlockSpec((tb, OUT), lambda i: (i, 0)),
        ),
        compiler_params=pltpu.CompilerParams(
            dimension_semantics=("parallel",),   # batch tiles shard across v7x TCs
            vmem_limit_bytes=vmem_limit,
        ),
        cost_estimate=cost,
    )(x, w_t, b)


if __name__ == "__main__":
    key = jax.random.PRNGKey(0)
    k_x, k_w, k_b = jax.random.split(key, 3)

    B, C, H, W, OUT = 2, 2048, 4, 4, 25   # C=2048 is fixed by Linear(2048, 25)

    # deterministic "backbone feature map" input (NCHW, as PyTorch would hand it)
    x = jax.random.normal(k_x, (B, C, H, W), dtype=jnp.float32)

    # deterministic Linear(2048, 25) params, PyTorch-style uniform(-1/sqrt(C), 1/sqrt(C))
    bound = 1.0 / jnp.sqrt(jnp.float32(C))
    weight = jax.random.uniform(k_w, (OUT, C), minval=-bound, maxval=bound,
                                dtype=jnp.float32)
    bias = jax.random.uniform(k_b, (OUT,), minval=-bound, maxval=bound,
                              dtype=jnp.float32)

    out = jax.block_until_ready(net_forward(x, weight, bias))

    # pure-JAX reference check of the head semantics
    ref = jnp.mean(x.reshape(B, C, H * W), axis=-1) @ weight.T + bias
    assert out.shape == (B, OUT)
    assert jnp.allclose(out, ref, atol=1e-4, rtol=1e-4)

    print("KERNEL_OK")
</pallas_src>

<mosaic_0001>
module attributes {stable_mosaic.version = 11 : i64} {
  func.func @_head_kernel(%arg0: i32, %arg1: memref<2x16x2048xf32, #tpu.memory_space<vmem>>, %arg2: memref<2048x25xf32, #tpu.memory_space<vmem>>, %arg3: memref<1x25xf32, #tpu.memory_space<vmem>>, %arg4: memref<2x25xf32, #tpu.memory_space<vmem>>) attributes {dimension_semantics = [#tpu.dimension_semantics<parallel>], iteration_bounds = array<i64: 1>, scalar_prefetch = 0 : i64, scratch_operands = 0 : i64, tpu.core_type = #tpu.core_type<tc>, window_params = [{transform_indices = @transform_0, window_bounds = array<i64: 2, 16, 2048>}, {pipeline_mode = #tpu.pipeline_mode<synchronous>, transform_indices = @transform_1, window_bounds = array<i64: 2048, 25>}, {pipeline_mode = #tpu.pipeline_mode<synchronous>, transform_indices = @transform_2, window_bounds = array<i64: 1, 25>}, {transform_indices = @transform_3, window_bounds = array<i64: 2, 25>}]} {
    %c0 = arith.constant 0 : index
    %c0_0 = arith.constant 0 : index
    %c0_1 = arith.constant 0 : index
    %0 = vector.load %arg1[%c0, %c0_0, %c0_1] : memref<2x16x2048xf32, #tpu.memory_space<vmem>>, vector<2x16x2048xf32>
    %cst = arith.constant dense<0.000000e+00> : vector<2x2048xf32>
    %1 = vector.multi_reduction <add>, %0, %cst [1] : vector<2x16x2048xf32> to vector<2x2048xf32>
    %c0_2 = arith.constant 0 : index
    %c0_3 = arith.constant 0 : index
    %2 = vector.load %arg2[%c0_2, %c0_3] : memref<2048x25xf32, #tpu.memory_space<vmem>>, vector<2048x25xf32>
    %cst_4 = arith.constant dense<0.000000e+00> : vector<2x25xf32>
    %3 = tpu.matmul %1, %2, %cst_4 {dimension_numbers = #tpu.dot_dimension_numbers<[1], [0], [0], [1], [0, 0, 1, 1], [], []>} : vector<2x2048xf32>, vector<2048x25xf32>, vector<2x25xf32> -> vector<2x25xf32>
    %cst_5 = arith.constant 6.250000e-02 : f32
    %4 = vector.broadcast %cst_5 : f32 to vector<2x25xf32>
    %5 = arith.mulf %3, %4 : vector<2x25xf32>
    %c0_6 = arith.constant 0 : index
    %c0_7 = arith.constant 0 : index
    %6 = vector.load %arg3[%c0_6, %c0_7] : memref<1x25xf32, #tpu.memory_space<vmem>>, vector<1x25xf32>
    %7 = vector.broadcast %6 : vector<1x25xf32> to vector<2x25xf32>
    %8 = arith.addf %5, %7 : vector<2x25xf32>
    %c0_8 = arith.constant 0 : index
    %c0_9 = arith.constant 0 : index
    %9 = vector.load %arg4[%c0_8, %c0_9] : memref<2x25xf32, #tpu.memory_space<vmem>>, vector<2x25xf32>
    tpu.vector_store %arg4[%c0_8, %c0_9], %8 {strides = array<i32>} : memref<2x25xf32, #tpu.memory_space<vmem>>, vector<2x25xf32>,
    return
  }
  func.func @transform_0(%arg0: i32) -> (i32, i32, i32) {
    %c0_i32 = arith.constant 0 : i32
    %c0_i32_0 = arith.constant 0 : i32
    %c0_i32_1 = arith.constant 0 : i32
    return %arg0, %c0_i32, %c0_i32_0 : i32, i32, i32
  }
  func.func @transform_1(%arg0: i32) -> (i32, i32) {
    %c0_i32 = arith.constant 0 : i32
    %c0_i32_0 = arith.constant 0 : i32
    %c0_i32_1 = arith.constant 0 : i32
    return %c0_i32, %c0_i32_0 : i32, i32
  }
  func.func @transform_2(%arg0: i32) -> (i32, i32) {
    %c0_i32 = arith.constant 0 : i32
    %c0_i32_0 = arith.constant 0 : i32
    %c0_i32_1 = arith.constant 0 : i32
    return %c0_i32, %c0_i32_0 : i32, i32
  }
  func.func @transform_3(%arg0: i32) -> (i32, i32) {
    %c0_i32 = arith.constant 0 : i32
    %c0_i32_0 = arith.constant 0 : i32
    return %arg0, %c0_i32 : i32, i32
  }
}

</mosaic_0001>

<llo_original>
// kernel: tpu_custom_call.1
$region0: #{tpu_custom_call.1}
  #allocation0 [shape = 'u32[]', space=smem, size = 0x4, offset = 0x4, fixed_abs, tag = 'smem constant byte address 0x4 - core index']
  #allocation1 [shape = 'u32[144,128]{1,0:T(1,128)}', space=vmem, size = 0x12000, scoped, tag = 'internal scratch']
  %s0 = inlined_call_operand.vmem [shape: f32[2,16,2048], index: 0, kind: input, shape index: {}]
  %s1 = inlined_call_operand.vmem [shape: f32[2048,25], index: 1, kind: input, shape index: {}]
  %s2 = inlined_call_operand.vmem [shape: f32[1,25], index: 2, kind: input, shape index: {}]
  %s3 = inlined_call_operand.hbm [shape: f32[2,25], index: 3, kind: output, shape index: {}]
  %s4 = sld [smem:[#allocation0]]
  $region22: #{tpu_custom_call.1} parent=0
    _
  %s6 = ssub.s32 1, %s4
  %s7 = scalar_select 0, %s6, %s4
  $region1: #{tpu_custom_call.1} parent=0
    #allocation2 [shape = 'u8[1024]{0}', space=vmem, size = 0x400, scoped, tag = 'output window, operand 0, single buffered']
    #allocation3 [shape = 's32[1]{0}', space=sflag, size = 0x4, scoped, tag = 'scoped memory for tpu_custom_call.1']
    %8 = vsyncpa [#allocation3], 0
    // Predicated region
    $region2: #{tpu_custom_call.1} parent=1 // pred_check
      _
    $region3: #{tpu_custom_call.1} parent=1 // pred_check_branch
      %10 = sbr.rel (0) target = $region5
    $region4: #{tpu_custom_call.1} parent=1 // pred_region
      _
    $region5: #{tpu_custom_call.1} parent=1 // pred_fallthru
      _
    // Predicated region
    $region6: #{tpu_custom_call.1} parent=1 // pred_check
      _
    $region7: #{tpu_custom_call.1} parent=1 // pred_check_branch
      %12 = sbr.rel (0) target = $region9
    $region8: #{tpu_custom_call.1} parent=1 // pred_region
      _
    $region9: #{tpu_custom_call.1} parent=1 // pred_fallthru
      _
    // Predicated region
    $region10: #{tpu_custom_call.1} parent=1 // pred_check
      _
    $region11: #{tpu_custom_call.1} parent=1 // pred_check_branch
      %14 = sbr.rel (0) target = $region13
    $region12: #{tpu_custom_call.1} parent=1 // pred_region
      _
    $region13: #{tpu_custom_call.1} parent=1 // pred_fallthru
      _
    %v15 = vld [vmem:[%s0] sm:$0xff]
    %v16 = vld [vmem:[%s0 + $0x8] sm:$0xff]
    %v17 = vld [vmem:[%s0 + $0x10] sm:$0xff]
    %v18 = vld [vmem:[%s0 + $0x18] sm:$0xff]
    %v19 = vld [vmem:[%s0 + $0x20] sm:$0xff]
    %v20 = vld [vmem:[%s0 + $0x28] sm:$0xff]
    %v21 = vld [vmem:[%s0 + $0x30] sm:$0xff]
    %v22 = vld [vmem:[%s0 + $0x38] sm:$0xff]
    %v23 = vld [vmem:[%s0 + $0x40] sm:$0xff]
    %v24 = vld [vmem:[%s0 + $0x48] sm:$0xff]
    %v25 = vld [vmem:[%s0 + $0x50] sm:$0xff]
    %v26 = vld [vmem:[%s0 + $0x58] sm:$0xff]
    %v27 = vld [vmem:[%s0 + $0x60] sm:$0xff]
    %v28 = vld [vmem:[%s0 + $0x68] sm:$0xff]
    %v29 = vld [vmem:[%s0 + $0x70] sm:$0xff]
    %v30 = vld [vmem:[%s0 + $0x78] sm:$0xff]
    %v31 = vld [vmem:[%s0 + $0x80] sm:$0xff]
    %v32 = vld [vmem:[%s0 + $0x88] sm:$0xff]
    %v33 = vld [vmem:[%s0 + $0x90] sm:$0xff]
    %v34 = vld [vmem:[%s0 + $0x98] sm:$0xff]
    %v35 = vld [vmem:[%s0 + $0xa0] sm:$0xff]
    %v36 = vld [vmem:[%s0 + $0xa8] sm:$0xff]
    %v37 = vld [vmem:[%s0 + $0xb0] sm:$0xff]
    %v38 = vld [vmem:[%s0 + $0xb8] sm:$0xff]
    %v39 = vld [vmem:[%s0 + $0xc0] sm:$0xff]
    %v40 = vld [vmem:[%s0 + $0xc8] sm:$0xff]
    %v41 = vld [vmem:[%s0 + $0xd0] sm:$0xff]
    %v42 = vld [vmem:[%s0 + $0xd8] sm:$0xff]
    %v43 = vld [vmem:[%s0 + $0xe0] sm:$0xff]
    %v44 = vld [vmem:[%s0 + $0xe8] sm:$0xff]
    %v45 = vld [vmem:[%s0 + $0xf0] sm:$0xff]
    %v46 = vld [vmem:[%s0 + $0xf8] sm:$0xff]
    %v47 = vld [vmem:[%s0 + $0x100] sm:$0xff]
    %v48 = vld [vmem:[%s0 + $0x108] sm:$0xff]
    %v49 = vld [vmem:[%s0 + $0x110] sm:$0xff]
    %v50 = vld [vmem:[%s0 + $0x118] sm:$0xff]
    %v51 = vld [vmem:[%s0 + $0x120] sm:$0xff]
    %v52 = vld [vmem:[%s0 + $0x128] sm:$0xff]
    %v53 = vld [vmem:[%s0 + $0x130] sm:$0xff]
    %v54 = vld [vmem:[%s0 + $0x138] sm:$0xff]
    %v55 = vld [vmem:[%s0 + $0x140] sm:$0xff]
    %v56 = vld [vmem:[%s0 + $0x148] sm:$0xff]
    %v57 = vld [vmem:[%s0 + $0x150] sm:$0xff]
    %v58 = vld [vmem:[%s0 + $0x158] sm:$0xff]
    %v59 = vld [vmem:[%s0 + $0x160] sm:$0xff]
    %v60 = vld [vmem:[%s0 + $0x168] sm:$0xff]
    %v61 = vld [vmem:[%s0 + $0x170] sm:$0xff]
    %v62 = vld [vmem:[%s0 + $0x178] sm:$0xff]
    %v63 = vld [vmem:[%s0 + $0x180] sm:$0xff]
    %v64 = vld [vmem:[%s0 + $0x188] sm:$0xff]
    %v65 = vld [vmem:[%s0 + $0x190] sm:$0xff]
    %v66 = vld [vmem:[%s0 + $0x198] sm:$0xff]
    %v67 = vld [vmem:[%s0 + $0x1a0] sm:$0xff]
    %v68 = vld [vmem:[%s0 + $0x1a8] sm:$0xff]
    %v69 = vld [vmem:[%s0 + $0x1b0] sm:$0xff]
    %v70 = vld [vmem:[%s0 + $0x1b8] sm:$0xff]
    %v71 = vld [vmem:[%s0 + $0x1c0] sm:$0xff]
    %v72 = vld [vmem:[%s0 + $0x1c8] sm:$0xff]
    %v73 = vld [vmem:[%s0 + $0x1d0] sm:$0xff]
    %v74 = vld [vmem:[%s0 + $0x1d8] sm:$0xff]
    %v75 = vld [vmem:[%s0 + $0x1e0] sm:$0xff]
    %v76 = vld [vmem:[%s0 + $0x1e8] sm:$0xff]
    %v77 = vld [vmem:[%s0 + $0x1f0] sm:$0xff]
    %v78 = vld [vmem:[%s0 + $0x1f8] sm:$0xff]
    %v79 = vadd.f32 %v15, %v31
    %v80 = vrot.slane %v79, 4
    %v81 = vadd.f32 %v79, %v80
    %v82 = vrot.slane %v81, 2
    %v83 = vadd.f32 %v81, %v82
    %v84 = vrot.slane %v83, 1
    %v85 = vadd.f32 %v83, %v84
    %v86 = vadd.f32 %v16, %v32
    %v87 = vrot.slane %v86, 4
    %v88 = vadd.f32 %v86, %v87
    %v89 = vrot.slane %v88, 2
    %v90 = vadd.f32 %v88, %v89
    %v91 = vrot.slane %v90, 1
    %v92 = vadd.f32 %v90, %v91
    %v93 = vadd.f32 %v17, %v33
    %v94 = vrot.slane %v93, 4
    %v95 = vadd.f32 %v93, %v94
    %v96 = vrot.slane %v95, 2
    %v97 = vadd.f32 %v95, %v96
    %v98 = vrot.slane %v97, 1
    %v99 = vadd.f32 %v97, %v98
    %v100 = vadd.f32 %v18, %v34
    %v101 = vrot.slane %v100, 4
    %v102 = vadd.f32 %v100, %v101
    %v103 = vrot.slane %v102, 2
    %v104 = vadd.f32 %v102, %v103
    %v105 = vrot.slane %v104, 1
    %v106 = vadd.f32 %v104, %v105
    %v107 = vadd.f32 %v19, %v35
    %v108 = vrot.slane %v107, 4
    %v109 = vadd.f32 %v107, %v108
    %v110 = vrot.slane %v109, 2
    %v111 = vadd.f32 %v109, %v110
    %v112 = vrot.slane %v111, 1
    %v113 = vadd.f32 %v111, %v112
    %v114 = vadd.f32 %v20, %v36
    %v115 = vrot.slane %v114, 4
    %v116 = vadd.f32 %v114, %v115
    %v117 = vrot.slane %v116, 2
    %v118 = vadd.f32 %v116, %v117
    %v119 = vrot.slane %v118, 1
    %v120 = vadd.f32 %v118, %v119
    %v121 = vadd.f32 %v21, %v37
    %v122 = vrot.slane %v121, 4
    %v123 = vadd.f32 %v121, %v122
    %v124 = vrot.slane %v123, 2
    %v125 = vadd.f32 %v123, %v124
    %v126 = vrot.slane %v125, 1
    %v127 = vadd.f32 %v125, %v126
    %v128 = vadd.f32 %v22, %v38
    %v129 = vrot.slane %v128, 4
    %v130 = vadd.f32 %v128, %v129
    %v131 = vrot.slane %v130, 2
    %v132 = vadd.f32 %v130, %v131
    %v133 = vrot.slane %v132, 1
    %v134 = vadd.f32 %v132, %v133
    %v135 = vadd.f32 %v23, %v39
    %v136 = vrot.slane %v135, 4
    %v137 = vadd.f32 %v135, %v136
    %v138 = vrot.slane %v137, 2
    %v139 = vadd.f32 %v137, %v138
    %v140 = vrot.slane %v139, 1
    %v141 = vadd.f32 %v139, %v140
    %v142 = vadd.f32 %v24, %v40
    %v143 = vrot.slane %v142, 4
    %v144 = vadd.f32 %v142, %v143
    %v145 = vrot.slane %v144, 2
    %v146 = vadd.f32 %v144, %v145
    %v147 = vrot.slane %v146, 1
    %v148 = vadd.f32 %v146, %v147
    %v149 = vadd.f32 %v25, %v41
    %v150 = vrot.slane %v149, 4
    %v151 = vadd.f32 %v149, %v150
    %v152 = vrot.slane %v151, 2
    %v153 = vadd.f32 %v151, %v152
    %v154 = vrot.slane %v153, 1
    %v155 = vadd.f32 %v153, %v154
    %v156 = vadd.f32 %v26, %v42
    %v157 = vrot.slane %v156, 4
    %v158 = vadd.f32 %v156, %v157
    %v159 = vrot.slane %v158, 2
    %v160 = vadd.f32 %v158, %v159
    %v161 = vrot.slane %v160, 1
    %v162 = vadd.f32 %v160, %v161
    %v163 = vadd.f32 %v27, %v43
    %v164 = vrot.slane %v163, 4
    %v165 = vadd.f32 %v163, %v164
    %v166 = vrot.slane %v165, 2
    %v167 = vadd.f32 %v165, %v166
    %v168 = vrot.slane %v167, 1
    %v169 = vadd.f32 %v167, %v168
    %v170 = vadd.f32 %v28, %v44
    %v171 = vrot.slane %v170, 4
    %v172 = vadd.f32 %v170, %v171
    %v173 = vrot.slane %v172, 2
    %v174 = vadd.f32 %v172, %v173
    %v175 = vrot.slane %v174, 1
    %v176 = vadd.f32 %v174, %v175
    %v177 = vadd.f32 %v29, %v45
    %v178 = vrot.slane %v177, 4
    %v179 = vadd.f32 %v177, %v178
    %v180 = vrot.slane %v179, 2
    %v181 = vadd.f32 %v179, %v180
    %v182 = vrot.slane %v181, 1
    %v183 = vadd.f32 %v181, %v182
    %v184 = vadd.f32 %v30, %v46
    %v185 = vrot.slane %v184, 4
    %v186 = vadd.f32 %v184, %v185
    %v187 = vrot.slane %v186, 2
    %v188 = vadd.f32 %v186, %v187
    %v189 = vrot.slane %v188, 1
    %v190 = vadd.f32 %v188, %v189
    %v191 = vadd.f32 %v47, %v63
    %v192 = vrot.slane %v191, 4
    %v193 = vadd.f32 %v191, %v192
    %v194 = vrot.slane %v193, 2
    %v195 = vadd.f32 %v193, %v194
    %v196 = vrot.slane %v195, 1
    %v197 = vadd.f32 %v195, %v196
    %v198 = vadd.f32 %v48, %v64
    %v199 = vrot.slane %v198, 4
    %v200 = vadd.f32 %v198, %v199
    %v201 = vrot.slane %v200, 2
    %v202 = vadd.f32 %v200, %v201
    %v203 = vrot.slane %v202, 1
    %v204 = vadd.f32 %v202, %v203
    %v205 = vadd.f32 %v49, %v65
    %v206 = vrot.slane %v205, 4
    %v207 = vadd.f32 %v205, %v206
    %v208 = vrot.slane %v207, 2
    %v209 = vadd.f32 %v207, %v208
    %v210 = vrot.slane %v209, 1
    %v211 = vadd.f32 %v209, %v210
    %v212 = vadd.f32 %v50, %v66
    %v213 = vrot.slane %v212, 4
    %v214 = vadd.f32 %v212, %v213
    %v215 = vrot.slane %v214, 2
    %v216 = vadd.f32 %v214, %v215
    %v217 = vrot.slane %v216, 1
    %v218 = vadd.f32 %v216, %v217
    %v219 = vadd.f32 %v51, %v67
    %v220 = vrot.slane %v219, 4
    %v221 = vadd.f32 %v219, %v220
    %v222 = vrot.slane %v221, 2
    %v223 = vadd.f32 %v221, %v222
    %v224 = vrot.slane %v223, 1
    %v225 = vadd.f32 %v223, %v224
    %v226 = vadd.f32 %v52, %v68
    %v227 = vrot.slane %v226, 4
    %v228 = vadd.f32 %v226, %v227
    %v229 = vrot.slane %v228, 2
    %v230 = vadd.f32 %v228, %v229
    %v231 = vrot.slane %v230, 1
    %v232 = vadd.f32 %v230, %v231
    %v233 = vadd.f32 %v53, %v69
    %v234 = vrot.slane %v233, 4
    %v235 = vadd.f32 %v233, %v234
    %v236 = vrot.slane %v235, 2
    %v237 = vadd.f32 %v235, %v236
    %v238 = vrot.slane %v237, 1
    %v239 = vadd.f32 %v237, %v238
    %v240 = vadd.f32 %v54, %v70
    %v241 = vrot.slane %v240, 4
    %v242 = vadd.f32 %v240, %v241
    %v243 = vrot.slane %v242, 2
    %v244 = vadd.f32 %v242, %v243
    %v245 = vrot.slane %v244, 1
    %v246 = vadd.f32 %v244, %v245
    %v247 = vadd.f32 %v55, %v71
    %v248 = vrot.slane %v247, 4
    %v249 = vadd.f32 %v247, %v248
    %v250 = vrot.slane %v249, 2
    %v251 = vadd.f32 %v249, %v250
    %v252 = vrot.slane %v251, 1
    %v253 = vadd.f32 %v251, %v252
    %v254 = vadd.f32 %v56, %v72
    %v255 = vrot.slane %v254, 4
    %v256 = vadd.f32 %v254, %v255
    %v257 = vrot.slane %v256, 2
    %v258 = vadd.f32 %v256, %v257
    %v259 = vrot.slane %v258, 1
    %v260 = vadd.f32 %v258, %v259
    %v261 = vadd.f32 %v57, %v73
    %v262 = vrot.slane %v261, 4
    %v263 = vadd.f32 %v261, %v262
    %v264 = vrot.slane %v263, 2
    %v265 = vadd.f32 %v263, %v264
    %v266 = vrot.slane %v265, 1
    %v267 = vadd.f32 %v265, %v266
    %v268 = vadd.f32 %v58, %v74
    %v269 = vrot.slane %v268, 4
    %v270 = vadd.f32 %v268, %v269
    %v271 = vrot.slane %v270, 2
    %v272 = vadd.f32 %v270, %v271
    %v273 = vrot.slane %v272, 1
    %v274 = vadd.f32 %v272, %v273
    %v275 = vadd.f32 %v59, %v75
    %v276 = vrot.slane %v275, 4
    %v277 = vadd.f32 %v275, %v276
    %v278 = vrot.slane %v277, 2
    %v279 = vadd.f32 %v277, %v278
    %v280 = vrot.slane %v279, 1
    %v281 = vadd.f32 %v279, %v280
    %v282 = vadd.f32 %v60, %v76
    %v283 = vrot.slane %v282, 4
    %v284 = vadd.f32 %v282, %v283
    %v285 = vrot.slane %v284, 2
    %v286 = vadd.f32 %v284, %v285
    %v287 = vrot.slane %v286, 1
    %v288 = vadd.f32 %v286, %v287
    %v289 = vadd.f32 %v61, %v77
    %v290 = vrot.slane %v289, 4
    %v291 = vadd.f32 %v289, %v290
    %v292 = vrot.slane %v291, 2
    %v293 = vadd.f32 %v291, %v292
    %v294 = vrot.slane %v293, 1
    %v295 = vadd.f32 %v293, %v294
    %v296 = vadd.f32 %v62, %v78
    %v297 = vrot.slane %v296, 4
    %v298 = vadd.f32 %v296, %v297
    %v299 = vrot.slane %v298, 2
    %v300 = vadd.f32 %v298, %v299
    %v301 = vrot.slane %v300, 1
    %v302 = vadd.f32 %v300, %v301
    %v303 = vld [vmem:[%s1] sm:$0xff]
    %v304 = vld [vmem:[%s1 + $0x8] sm:$0xff]
    %v305 = vld [vmem:[%s1 + $0x10] sm:$0xff]
    %v306 = vld [vmem:[%s1 + $0x18] sm:$0xff]
    %v307 = vld [vmem:[%s1 + $0x20] sm:$0xff]
    %v308 = vld [vmem:[%s1 + $0x28] sm:$0xff]
    %v309 = vld [vmem:[%s1 + $0x30] sm:$0xff]
    %v310 = vld [vmem:[%s1 + $0x38] sm:$0xff]
    %v311 = vld [vmem:[%s1 + $0x40] sm:$0xff]
    %v312 = vld [vmem:[%s1 + $0x48] sm:$0xff]
    %v313 = vld [vmem:[%s1 + $0x50] sm:$0xff]
    %v314 = vld [vmem:[%s1 + $0x58] sm:$0xff]
    %v315 = vld [vmem:[%s1 + $0x60] sm:$0xff]
    %v316 = vld [vmem:[%s1 + $0x68] sm:$0xff]
    %v317 = vld [vmem:[%s1 + $0x70] sm:$0xff]
    %v318 = vld [vmem:[%s1 + $0x78] sm:$0xff]
    %v319 = vld [vmem:[%s1 + $0x80] sm:$0xff]
    %v320 = vld [vmem:[%s1 + $0x88] sm:$0xff]
    %v321 = vld [vmem:[%s1 + $0x90] sm:$0xff]
    %v322 = vld [vmem:[%s1 + $0x98] sm:$0xff]
    %v323 = vld [vmem:[%s1 + $0xa0] sm:$0xff]
    %v324 = vld [vmem:[%s1 + $0xa8] sm:$0xff]
    %v325 = vld [vmem:[%s1 + $0xb0] sm:$0xff]
    %v326 = vld [vmem:[%s1 + $0xb8] sm:$0xff]
    %v327 = vld [vmem:[%s1 + $0xc0] sm:$0xff]
    %v328 = vld [vmem:[%s1 + $0xc8] sm:$0xff]
    %v329 = vld [vmem:[%s1 + $0xd0] sm:$0xff]
    %v330 = vld [vmem:[%s1 + $0xd8] sm:$0xff]
    %v331 = vld [vmem:[%s1 + $0xe0] sm:$0xff]
    %v332 = vld [vmem:[%s1 + $0xe8] sm:$0xff]
    %v333 = vld [vmem:[%s1 + $0xf0] sm:$0xff]
    %v334 = vld [vmem:[%s1 + $0xf8] sm:$0xff]
    %v335 = vld [vmem:[%s1 + $0x100] sm:$0xff]
    %v336 = vld [vmem:[%s1 + $0x108] sm:$0xff]
    %v337 = vld [vmem:[%s1 + $0x110] sm:$0xff]
    %v338 = vld [vmem:[%s1 + $0x118] sm:$0xff]
    %v339 = vld [vmem:[%s1 + $0x120] sm:$0xff]
    %v340 = vld [vmem:[%s1 + $0x128] sm:$0xff]
    %v341 = vld [vmem:[%s1 + $0x130] sm:$0xff]
    %v342 = vld [vmem:[%s1 + $0x138] sm:$0xff]
    %v343 = vld [vmem:[%s1 + $0x140] sm:$0xff]
    %v344 = vld [vmem:[%s1 + $0x148] sm:$0xff]
    %v345 = vld [vmem:[%s1 + $0x150] sm:$0xff]
    %v346 = vld [vmem:[%s1 + $0x158] sm:$0xff]
    %v347 = vld [vmem:[%s1 + $0x160] sm:$0xff]
    %v348 = vld [vmem:[%s1 + $0x168] sm:$0xff]
    %v349 = vld [vmem:[%s1 + $0x170] sm:$0xff]
    %v350 = vld [vmem:[%s1 + $0x178] sm:$0xff]
    %v351 = vld [vmem:[%s1 + $0x180] sm:$0xff]
    %v352 = vld [vmem:[%s1 + $0x188] sm:$0xff]
    %v353 = vld [vmem:[%s1 + $0x190] sm:$0xff]
    %v354 = vld [vmem:[%s1 + $0x198] sm:$0xff]
    %v355 = vld [vmem:[%s1 + $0x1a0] sm:$0xff]
    %v356 = vld [vmem:[%s1 + $0x1a8] sm:$0xff]
    %v357 = vld [vmem:[%s1 + $0x1b0] sm:$0xff]
    %v358 = vld [vmem:[%s1 + $0x1b8] sm:$0xff]
    %v359 = vld [vmem:[%s1 + $0x1c0] sm:$0xff]
    %v360 = vld [vmem:[%s1 + $0x1c8] sm:$0xff]
    %v361 = vld [vmem:[%s1 + $0x1d0] sm:$0xff]
    %v362 = vld [vmem:[%s1 + $0x1d8] sm:$0xff]
    %v363 = vld [vmem:[%s1 + $0x1e0] sm:$0xff]
    %v364 = vld [vmem:[%s1 + $0x1e8] sm:$0xff]
    %v365 = vld [vmem:[%s1 + $0x1f0] sm:$0xff]
    %v366 = vld [vmem:[%s1 + $0x1f8] sm:$0xff]
    %v367 = vld [vmem:[%s1 + $0x200] sm:$0xff]
    %v368 = vld [vmem:[%s1 + $0x208] sm:$0xff]
    %v369 = vld [vmem:[%s1 + $0x210] sm:$0xff]
    %v370 = vld [vmem:[%s1 + $0x218] sm:$0xff]
    %v371 = vld [vmem:[%s1 + $0x220] sm:$0xff]
    %v372 = vld [vmem:[%s1 + $0x228] sm:$0xff]
    %v373 = vld [vmem:[%s1 + $0x230] sm:$0xff]
    %v374 = vld [vmem:[%s1 + $0x238] sm:$0xff]
    %v375 = vld [vmem:[%s1 + $0x240] sm:$0xff]
    %v376 = vld [vmem:[%s1 + $0x248] sm:$0xff]
    %v377 = vld [vmem:[%s1 + $0x250] sm:$0xff]
    %v378 = vld [vmem:[%s1 + $0x258] sm:$0xff]
    %v379 = vld [vmem:[%s1 + $0x260] sm:$0xff]
    %v380 = vld [vmem:[%s1 + $0x268] sm:$0xff]
    %v381 = vld [vmem:[%s1 + $0x270] sm:$0xff]
    %v382 = vld [vmem:[%s1 + $0x278] sm:$0xff]
    %v383 = vld [vmem:[%s1 + $0x280] sm:$0xff]
    %v384 = vld [vmem:[%s1 + $0x288] sm:$0xff]
    %v385 = vld [vmem:[%s1 + $0x290] sm:$0xff]
    %v386 = vld [vmem:[%s1 + $0x298] sm:$0xff]
    %v387 = vld [vmem:[%s1 + $0x2a0] sm:$0xff]
    %v388 = vld [vmem:[%s1 + $0x2a8] sm:$0xff]
    %v389 = vld [vmem:[%s1 + $0x2b0] sm:$0xff]
    %v390 = vld [vmem:[%s1 + $0x2b8] sm:$0xff]
    %v391 = vld [vmem:[%s1 + $0x2c0] sm:$0xff]
    %v392 = vld [vmem:[%s1 + $0x2c8] sm:$0xff]
    %v393 = vld [vmem:[%s1 + $0x2d0] sm:$0xff]
    %v394 = vld [vmem:[%s1 + $0x2d8] sm:$0xff]
    %v395 = vld [vmem:[%s1 + $0x2e0] sm:$0xff]
    %v396 = vld [vmem:[%s1 + $0x2e8] sm:$0xff]
    %v397 = vld [vmem:[%s1 + $0x2f0] sm:$0xff]
    %v398 = vld [vmem:[%s1 + $0x2f8] sm:$0xff]
    %v399 = vld [vmem:[%s1 + $0x300] sm:$0xff]
    %v400 = vld [vmem:[%s1 + $0x308] sm:$0xff]
    %v401 = vld [vmem:[%s1 + $0x310] sm:$0xff]
    %v402 = vld [vmem:[%s1 + $0x318] sm:$0xff]
    %v403 = vld [vmem:[%s1 + $0x320] sm:$0xff]
    %v404 = vld [vmem:[%s1 + $0x328] sm:$0xff]
    %v405 = vld [vmem:[%s1 + $0x330] sm:$0xff]
    %v406 = vld [vmem:[%s1 + $0x338] sm:$0xff]
    %v407 = vld [vmem:[%s1 + $0x340] sm:$0xff]
    %v408 = vld [vmem:[%s1 + $0x348] sm:$0xff]
    %v409 = vld [vmem:[%s1 + $0x350] sm:$0xff]
    %v410 = vld [vmem:[%s1 + $0x358] sm:$0xff]
    %v411 = vld [vmem:[%s1 + $0x360] sm:$0xff]
    %v412 = vld [vmem:[%s1 + $0x368] sm:$0xff]
    %v413 = vld [vmem:[%s1 + $0x370] sm:$0xff]
    %v414 = vld [vmem:[%s1 + $0x378] sm:$0xff]
    %v415 = vld [vmem:[%s1 + $0x380] sm:$0xff]
    %v416 = vld [vmem:[%s1 + $0x388] sm:$0xff]
    %v417 = vld [vmem:[%s1 + $0x390] sm:$0xff]
    %v418 = vld [vmem:[%s1 + $0x398] sm:$0xff]
    %v419 = vld [vmem:[%s1 + $0x3a0] sm:$0xff]
    %v420 = vld [vmem:[%s1 + $0x3a8] sm:$0xff]
    %v421 = vld [vmem:[%s1 + $0x3b0] sm:$0xff]
    %v422 = vld [vmem:[%s1 + $0x3b8] sm:$0xff]
    %v423 = vld [vmem:[%s1 + $0x3c0] sm:$0xff]
    %v424 = vld [vmem:[%s1 + $0x3c8] sm:$0xff]
    %v425 = vld [vmem:[%s1 + $0x3d0] sm:$0xff]
    %v426 = vld [vmem:[%s1 + $0x3d8] sm:$0xff]
    %v427 = vld [vmem:[%s1 + $0x3e0] sm:$0xff]
    %v428 = vld [vmem:[%s1 + $0x3e8] sm:$0xff]
    %v429 = vld [vmem:[%s1 + $0x3f0] sm:$0xff]
    %v430 = vld [vmem:[%s1 + $0x3f8] sm:$0xff]
    %v431 = vld [vmem:[%s1 + $0x400] sm:$0xff]
    %v432 = vld [vmem:[%s1 + $0x408] sm:$0xff]
    %v433 = vld [vmem:[%s1 + $0x410] sm:$0xff]
    %v434 = vld [vmem:[%s1 + $0x418] sm:$0xff]
    %v435 = vld [vmem:[%s1 + $0x420] sm:$0xff]
    %v436 = vld [vmem:[%s1 + $0x428] sm:$0xff]
    %v437 = vld [vmem:[%s1 + $0x430] sm:$0xff]
    %v438 = vld [vmem:[%s1 + $0x438] sm:$0xff]
    %v439 = vld [vmem:[%s1 + $0x440] sm:$0xff]
    %v440 = vld [vmem:[%s1 + $0x448] sm:$0xff]
    %v441 = vld [vmem:[%s1 + $0x450] sm:$0xff]
    %v442 = vld [vmem:[%s1 + $0x458] sm:$0xff]
    %v443 = vld [vmem:[%s1 + $0x460] sm:$0xff]
    %v444 = vld [vmem:[%s1 + $0x468] sm:$0xff]
    %v445 = vld [vmem:[%s1 + $0x470] sm:$0xff]
    %v446 = vld [vmem:[%s1 + $0x478] sm:$0xff]
    %v447 = vld [vmem:[%s1 + $0x480] sm:$0xff]
    %v448 = vld [vmem:[%s1 + $0x488] sm:$0xff]
    %v449 = vld [vmem:[%s1 + $0x490] sm:$0xff]
    %v450 = vld [vmem:[%s1 + $0x498] sm:$0xff]
    %v451 = vld [vmem:[%s1 + $0x4a0] sm:$0xff]
    %v452 = vld [vmem:[%s1 + $0x4a8] sm:$0xff]
    %v453 = vld [vmem:[%s1 + $0x4b0] sm:$0xff]
    %v454 = vld [vmem:[%s1 + $0x4b8] sm:$0xff]
    %v455 = vld [vmem:[%s1 + $0x4c0] sm:$0xff]
    %v456 = vld [vmem:[%s1 + $0x4c8] sm:$0xff]
    %v457 = vld [vmem:[%s1 + $0x4d0] sm:$0xff]
    %v458 = vld [vmem:[%s1 + $0x4d8] sm:$0xff]
    %v459 = vld [vmem:[%s1 + $0x4e0] sm:$0xff]
    %v460 = vld [vmem:[%s1 + $0x4e8] sm:$0xff]
    %v461 = vld [vmem:[%s1 + $0x4f0] sm:$0xff]
    %v462 = vld [vmem:[%s1 + $0x4f8] sm:$0xff]
    %v463 = vld [vmem:[%s1 + $0x500] sm:$0xff]
    %v464 = vld [vmem:[%s1 + $0x508] sm:$0xff]
    %v465 = vld [vmem:[%s1 + $0x510] sm:$0xff]
    %v466 = vld [vmem:[%s1 + $0x518] sm:$0xff]
    %v467 = vld [vmem:[%s1 + $0x520] sm:$0xff]
    %v468 = vld [vmem:[%s1 + $0x528] sm:$0xff]
    %v469 = vld [vmem:[%s1 + $0x530] sm:$0xff]
    %v470 = vld [vmem:[%s1 + $0x538] sm:$0xff]
    %v471 = vld [vmem:[%s1 + $0x540] sm:$0xff]
    %v472 = vld [vmem:[%s1 + $0x548] sm:$0xff]
    %v473 = vld [vmem:[%s1 + $0x550] sm:$0xff]
    %v474 = vld [vmem:[%s1 + $0x558] sm:$0xff]
    %v475 = vld [vmem:[%s1 + $0x560] sm:$0xff]
    %v476 = vld [vmem:[%s1 + $0x568] sm:$0xff]
    %v477 = vld [vmem:[%s1 + $0x570] sm:$0xff]
    %v478 = vld [vmem:[%s1 + $0x578] sm:$0xff]
    %v479 = vld [vmem:[%s1 + $0x580] sm:$0xff]
    %v480 = vld [vmem:[%s1 + $0x588] sm:$0xff]
    %v481 = vld [vmem:[%s1 + $0x590] sm:$0xff]
    %v482 = vld [vmem:[%s1 + $0x598] sm:$0xff]
    %v483 = vld [vmem:[%s1 + $0x5a0] sm:$0xff]
    %v484 = vld [vmem:[%s1 + $0x5a8] sm:$0xff]
    %v485 = vld [vmem:[%s1 + $0x5b0] sm:$0xff]
    %v486 = vld [vmem:[%s1 + $0x5b8] sm:$0xff]
    %v487 = vld [vmem:[%s1 + $0x5c0] sm:$0xff]
    %v488 = vld [vmem:[%s1 + $0x5c8] sm:$0xff]
    %v489 = vld [vmem:[%s1 + $0x5d0] sm:$0xff]
    %v490 = vld [vmem:[%s1 + $0x5d8] sm:$0xff]
    %v491 = vld [vmem:[%s1 + $0x5e0] sm:$0xff]
    %v492 = vld [vmem:[%s1 + $0x5e8] sm:$0xff]
    %v493 = vld [vmem:[%s1 + $0x5f0] sm:$0xff]
    %v494 = vld [vmem:[%s1 + $0x5f8] sm:$0xff]
    %v495 = vld [vmem:[%s1 + $0x600] sm:$0xff]
    %v496 = vld [vmem:[%s1 + $0x608] sm:$0xff]
    %v497 = vld [vmem:[%s1 + $0x610] sm:$0xff]
    %v498 = vld [vmem:[%s1 + $0x618] sm:$0xff]
    %v499 = vld [vmem:[%s1 + $0x620] sm:$0xff]
    %v500 = vld [vmem:[%s1 + $0x628] sm:$0xff]
    %v501 = vld [vmem:[%s1 + $0x630] sm:$0xff]
    %v502 = vld [vmem:[%s1 + $0x638] sm:$0xff]
    %v503 = vld [vmem:[%s1 + $0x640] sm:$0xff]
    %v504 = vld [vmem:[%s1 + $0x648] sm:$0xff]
    %v505 = vld [vmem:[%s1 + $0x650] sm:$0xff]
    %v506 = vld [vmem:[%s1 + $0x658] sm:$0xff]
    %v507 = vld [vmem:[%s1 + $0x660] sm:$0xff]
    %v508 = vld [vmem:[%s1 + $0x668] sm:$0xff]
    %v509 = vld [vmem:[%s1 + $0x670] sm:$0xff]
    %v510 = vld [vmem:[%s1 + $0x678] sm:$0xff]
    %v511 = vld [vmem:[%s1 + $0x680] sm:$0xff]
    %v512 = vld [vmem:[%s1 + $0x688] sm:$0xff]
    %v513 = vld [vmem:[%s1 + $0x690] sm:$0xff]
    %v514 = vld [vmem:[%s1 + $0x698] sm:$0xff]
    %v515 = vld [vmem:[%s1 + $0x6a0] sm:$0xff]
    %v516 = vld [vmem:[%s1 + $0x6a8] sm:$0xff]
    %v517 = vld [vmem:[%s1 + $0x6b0] sm:$0xff]
    %v518 = vld [vmem:[%s1 + $0x6b8] sm:$0xff]
    %v519 = vld [vmem:[%s1 + $0x6c0] sm:$0xff]
    %v520 = vld [vmem:[%s1 + $0x6c8] sm:$0xff]
    %v521 = vld [vmem:[%s1 + $0x6d0] sm:$0xff]
    %v522 = vld [vmem:[%s1 + $0x6d8] sm:$0xff]
    %v523 = vld [vmem:[%s1 + $0x6e0] sm:$0xff]
    %v524 = vld [vmem:[%s1 + $0x6e8] sm:$0xff]
    %v525 = vld [vmem:[%s1 + $0x6f0] sm:$0xff]
    %v526 = vld [vmem:[%s1 + $0x6f8] sm:$0xff]
    %v527 = vld [vmem:[%s1 + $0x700] sm:$0xff]
    %v528 = vld [vmem:[%s1 + $0x708] sm:$0xff]
    %v529 = vld [vmem:[%s1 + $0x710] sm:$0xff]
    %v530 = vld [vmem:[%s1 + $0x718] sm:$0xff]
    %v531 = vld [vmem:[%s1 + $0x720] sm:$0xff]
    %v532 = vld [vmem:[%s1 + $0x728] sm:$0xff]
    %v533 = vld [vmem:[%s1 + $0x730] sm:$0xff]
    %v534 = vld [vmem:[%s1 + $0x738] sm:$0xff]
    %v535 = vld [vmem:[%s1 + $0x740] sm:$0xff]
    %v536 = vld [vmem:[%s1 + $0x748] sm:$0xff]
    %v537 = vld [vmem:[%s1 + $0x750] sm:$0xff]
    %v538 = vld [vmem:[%s1 + $0x758] sm:$0xff]
    %v539 = vld [vmem:[%s1 + $0x760] sm:$0xff]
    %v540 = vld [vmem:[%s1 + $0x768] sm:$0xff]
    %v541 = vld [vmem:[%s1 + $0x770] sm:$0xff]
    %v542 = vld [vmem:[%s1 + $0x778] sm:$0xff]
    %v543 = vld [vmem:[%s1 + $0x780] sm:$0xff]
    %v544 = vld [vmem:[%s1 + $0x788] sm:$0xff]
    %v545 = vld [vmem:[%s1 + $0x790] sm:$0xff]
    %v546 = vld [vmem:[%s1 + $0x798] sm:$0xff]
    %v547 = vld [vmem:[%s1 + $0x7a0] sm:$0xff]
    %v548 = vld [vmem:[%s1 + $0x7a8] sm:$0xff]
    %v549 = vld [vmem:[%s1 + $0x7b0] sm:$0xff]
    %v550 = vld [vmem:[%s1 + $0x7b8] sm:$0xff]
    %v551 = vld [vmem:[%s1 + $0x7c0] sm:$0xff]
    %v552 = vld [vmem:[%s1 + $0x7c8] sm:$0xff]
    %v553 = vld [vmem:[%s1 + $0x7d0] sm:$0xff]
    %v554 = vld [vmem:[%s1 + $0x7d8] sm:$0xff]
    %v555 = vld [vmem:[%s1 + $0x7e0] sm:$0xff]
    %v556 = vld [vmem:[%s1 + $0x7e8] sm:$0xff]
    %v557 = vld [vmem:[%s1 + $0x7f0] sm:$0xff]
    %v558 = vld [vmem:[%s1 + $0x7f8] sm:$0xff]
    %vm591 = vcmask 1041409
    %v592 = vsel %vm591, %v197, %v85
    %v593 = vsel %vm591, %v204, %v92
    %v594 = vsel %vm591, %v211, %v99
    %v595 = vsel %vm591, %v218, %v106
    %v596 = vsel %vm591, %v225, %v113
    %v597 = vsel %vm591, %v232, %v120
    %v598 = vsel %vm591, %v239, %v127
    %v599 = vsel %vm591, %v246, %v134
    %v600 = vsel %vm591, %v253, %v141
    %v601 = vsel %vm591, %v260, %v148
    %v602 = vsel %vm591, %v267, %v155
    %v603 = vsel %vm591, %v274, %v162
    %v604 = vsel %vm591, %v281, %v169
    %v605 = vsel %vm591, %v288, %v176
    %v606 = vsel %vm591, %v295, %v183
    %v607 = vsel %vm591, %v302, %v190
    %624 = vmatprep.subr.mxu0 0.0
    %625 = vmatpush1.msra.mxu0 %v303
    %626 = vmatprep.subr.mxu0 0.0
    %627 = vmatpush1.msra.mxu0 %v304
    %628 = vmatprep.subr.mxu0 0.0
    %629 = vmatpush1.msra.mxu0 %v305
    %630 = vmatprep.subr.mxu0 0.0
    %631 = vmatpush1.msra.mxu0 %v306
    %632 = vmatprep.subr.mxu0 0.0
    %633 = vmatpush1.msra.mxu0 %v307
    %634 = vmatprep.subr.mxu0 0.0
    %635 = vmatpush1.msra.mxu0 %v308
    %636 = vmatprep.subr.mxu0 0.0
    %637 = vmatpush1.msra.mxu0 %v309
    %638 = vmatprep.subr.mxu0 0.0
    %639 = vmatpush1.msra.mxu0 %v310
    %640 = vmatprep.subr.mxu0 0.0
    %641 = vmatpush1.msra.mxu0 %v311
    %642 = vmatprep.subr.mxu0 0.0
    %643 = vmatpush1.msra.mxu0 %v312
    %644 = vmatprep.subr.mxu0 0.0
    %645 = vmatpush1.msra.mxu0 %v313
    %646 = vmatprep.subr.mxu0 0.0
    %647 = vmatpush1.msra.mxu0 %v314
    %648 = vmatprep.subr.mxu0 0.0
    %649 = vmatpush1.msra.mxu0 %v315
    %650 = vmatprep.subr.mxu0 0.0
    %651 = vmatpush1.msra.mxu0 %v316
    %652 = vmatprep.subr.mxu0 0.0
    %653 = vmatpush1.msra.mxu0 %v317
    %654 = vmatprep.subr.mxu0 0.0
    %655 = vmatpush1.msra.mxu0 %v318
    %656 = vmatprep.subr.mxu0 0.0
    %657 = vmatpush1.msra.mxu0 %v319
    %658 = vmatprep.subr.mxu0 0.0
    %659 = vmatpush1.msra.mxu0 %v320
    %660 = vmatprep.subr.mxu0 0.0
    %661 = vmatpush1.msra.mxu0 %v321
    %662 = vmatprep.subr.mxu0 0.0
    %663 = vmatpush1.msra.mxu0 %v322
    %664 = vmatprep.subr.mxu0 0.0
    %665 = vmatpush1.msra.mxu0 %v323
    %666 = vmatprep.subr.mxu0 0.0
    %667 = vmatpush1.msra.mxu0 %v324
    %668 = vmatprep.subr.mxu0 0.0
    %669 = vmatpush1.msra.mxu0 %v325
    %670 = vmatprep.subr.mxu0 0.0
    %671 = vmatpush1.msra.mxu0 %v326
    %672 = vmatprep.subr.mxu0 0.0
    %673 = vmatpush1.msra.mxu0 %v327
    %674 = vmatprep.subr.mxu0 0.0
    %675 = vmatpush1.msra.mxu0 %v328
    %676 = vmatprep.subr.mxu0 0.0
    %677 = vmatpush1.msra.mxu0 %v329
    %678 = vmatprep.subr.mxu0 0.0
    %679 = vmatpush1.msra.mxu0 %v330
    %680 = vmatprep.subr.mxu0 0.0
    %681 = vmatpush1.msra.mxu0 %v331
    %682 = vmatprep.subr.mxu0 0.0
    %683 = vmatpush1.msra.mxu0 %v332
    %684 = vmatprep.subr.mxu0 0.0
    %685 = vmatpush1.msra.mxu0 %v333
    %686 = vmatprep.subr.mxu0 0.0
    %687 = vmatpush1.msra.mxu0 %v334
    %688 = vmatprep.mubr.f32.mxu0 %v593
    %689 = vmatmul.mubr.f32.gmra.mrb[0].mxu0 %v592
    %v690 = vpop.f32.mrb[0].mxu0
    %v691 = vadd.f32 0.0, %v690
    %v692 = vpop.f32.mrb[0].mxu0
    %693 = vdwg.mxu0
    %694 = vmatprep.subr.mxu0 0.0
    %695 = vmatpush1.msra.mxu0 %v335
    %696 = vmatprep.subr.mxu0 0.0
    %697 = vmatpush1.msra.mxu0 %v336
    %698 = vmatprep.subr.mxu0 0.0
    %699 = vmatpush1.msra.mxu0 %v337
    %700 = vmatprep.subr.mxu0 0.0
    %701 = vmatpush1.msra.mxu0 %v338
    %702 = vmatprep.subr.mxu0 0.0
    %703 = vmatpush1.msra.mxu0 %v339
    %704 = vmatprep.subr.mxu0 0.0
    %705 = vmatpush1.msra.mxu0 %v340
    %706 = vmatprep.subr.mxu0 0.0
    %707 = vmatpush1.msra.mxu0 %v341
    %708 = vmatprep.subr.mxu0 0.0
    %709 = vmatpush1.msra.mxu0 %v342
    %710 = vmatprep.subr.mxu0 0.0
    %711 = vmatpush1.msra.mxu0 %v343
    %712 = vmatprep.subr.mxu0 0.0
    %713 = vmatpush1.msra.mxu0 %v344
    %714 = vmatprep.subr.mxu0 0.0
    %715 = vmatpush1.msra.mxu0 %v345
    %716 = vmatprep.subr.mxu0 0.0
    %717 = vmatpush1.msra.mxu0 %v346
    %718 = vmatprep.subr.mxu0 0.0
    %719 = vmatpush1.msra.mxu0 %v347
    %720 = vmatprep.subr.mxu0 0.0
    %721 = vmatpush1.msra.mxu0 %v348
    %722 = vmatprep.subr.mxu0 0.0
    %723 = vmatpush1.msra.mxu0 %v349
    %724 = vmatprep.subr.mxu0 0.0
    %725 = vmatpush1.msra.mxu0 %v350
    %726 = vmatprep.subr.mxu0 0.0
    %727 = vmatpush1.msra.mxu0 %v351
    %728 = vmatprep.subr.mxu0 0.0
    %729 = vmatpush1.msra.mxu0 %v352
    %730 = vmatprep.subr.mxu0 0.0
    %731 = vmatpush1.msra.mxu0 %v353
    %732 = vmatprep.subr.mxu0 0.0
    %733 = vmatpush1.msra.mxu0 %v354
    %734 = vmatprep.subr.mxu0 0.0
    %735 = vmatpush1.msra.mxu0 %v355
    %736 = vmatprep.subr.mxu0 0.0
    %737 = vmatpush1.msra.mxu0 %v356
    %738 = vmatprep.subr.mxu0 0.0
    %739 = vmatpush1.msra.mxu0 %v357
    %740 = vmatprep.subr.mxu0 0.0
    %741 = vmatpush1.msra.mxu0 %v358
    %742 = vmatprep.subr.mxu0 0.0
    %743 = vmatpush1.msra.mxu0 %v359
    %744 = vmatprep.subr.mxu0 0.0
    %745 = vmatpush1.msra.mxu0 %v360
    %746 = vmatprep.subr.mxu0 0.0
    %747 = vmatpush1.msra.mxu0 %v361
    %748 = vmatprep.subr.mxu0 0.0
    %749 = vmatpush1.msra.mxu0 %v362
    %750 = vmatprep.subr.mxu0 0.0
    %751 = vmatpush1.msra.mxu0 %v363
    %752 = vmatprep.subr.mxu0 0.0
    %753 = vmatpush1.msra.mxu0 %v364
    %754 = vmatprep.subr.mxu0 0.0
    %755 = vmatpush1.msra.mxu0 %v365
    %756 = vmatprep.subr.mxu0 0.0
    %757 = vmatpush1.msra.mxu0 %v366
    %758 = vmatprep.mubr.f32.mxu0 %v595
    %759 = vmatmul.mubr.f32.gmra.mrb[0].mxu0 %v594
    %v760 = vpop.f32.mrb[0].mxu0
    %v761 = vadd.f32 %v691, %v760
    %v762 = vpop.f32.mrb[0].mxu0
    %763 = vdwg.mxu0
    %764 = vmatprep.subr.mxu0 0.0
    %765 = vmatpush1.msra.mxu0 %v367
    %766 = vmatprep.subr.mxu0 0.0
    %767 = vmatpush1.msra.mxu0 %v368
    %768 = vmatprep.subr.mxu0 0.0
    %769 = vmatpush1.msra.mxu0 %v369
    %770 = vmatprep.subr.mxu0 0.0
    %771 = vmatpush1.msra.mxu0 %v370
    %772 = vmatprep.subr.mxu0 0.0
    %773 = vmatpush1.msra.mxu0 %v371
    %774 = vmatprep.subr.mxu0 0.0
    %775 = vmatpush1.msra.mxu0 %v372
    %776 = vmatprep.subr.mxu0 0.0
    %777 = vmatpush1.msra.mxu0 %v373
    %778 = vmatprep.subr.mxu0 0.0
    %779 = vmatpush1.msra.mxu0 %v374
    %780 = vmatprep.subr.mxu0 0.0
    %781 = vmatpush1.msra.mxu0 %v375
    %782 = vmatprep.subr.mxu0 0.0
    %783 = vmatpush1.msra.mxu0 %v376
    %784 = vmatprep.subr.mxu0 0.0
    %785 = vmatpush1.msra.mxu0 %v377
    %786 = vmatprep.subr.mxu0 0.0
    %787 = vmatpush1.msra.mxu0 %v378
    %788 = vmatprep.subr.mxu0 0.0
    %789 = vmatpush1.msra.mxu0 %v379
    %790 = vmatprep.subr.mxu0 0.0
    %791 = vmatpush1.msra.mxu0 %v380
    %792 = vmatprep.subr.mxu0 0.0
    %793 = vmatpush1.msra.mxu0 %v381
    %794 = vmatprep.subr.mxu0 0.0
    %795 = vmatpush1.msra.mxu0 %v382
    %796 = vmatprep.subr.mxu0 0.0
    %797 = vmatpush1.msra.mxu0 %v383
    %798 = vmatprep.subr.mxu0 0.0
    %799 = vmatpush1.msra.mxu0 %v384
    %800 = vmatprep.subr.mxu0 0.0
    %801 = vmatpush1.msra.mxu0 %v385
    %802 = vmatprep.subr.mxu0 0.0
    %803 = vmatpush1.msra.mxu0 %v386
    %804 = vmatprep.subr.mxu0 0.0
    %805 = vmatpush1.msra.mxu0 %v387
    %806 = vmatprep.subr.mxu0 0.0
    %807 = vmatpush1.msra.mxu0 %v388
    %808 = vmatprep.subr.mxu0 0.0
    %809 = vmatpush1.msra.mxu0 %v389
    %810 = vmatprep.subr.mxu0 0.0
    %811 = vmatpush1.msra.mxu0 %v390
    %812 = vmatprep.subr.mxu0 0.0
    %813 = vmatpush1.msra.mxu0 %v391
    %814 = vmatprep.subr.mxu0 0.0
    %815 = vmatpush1.msra.mxu0 %v392
    %816 = vmatprep.subr.mxu0 0.0
    %817 = vmatpush1.msra.mxu0 %v393
    %818 = vmatprep.subr.mxu0 0.0
    %819 = vmatpush1.msra.mxu0 %v394
    %820 = vmatprep.subr.mxu0 0.0
    %821 = vmatpush1.msra.mxu0 %v395
    %822 = vmatprep.subr.mxu0 0.0
    %823 = vmatpush1.msra.mxu0 %v396
    %824 = vmatprep.subr.mxu0 0.0
    %825 = vmatpush1.msra.mxu0 %v397
    %826 = vmatprep.subr.mxu0 0.0
    %827 = vmatpush1.msra.mxu0 %v398
    %828 = vmatprep.mubr.f32.mxu0 %v597
    %829 = vmatmul.mubr.f32.gmra.mrb[0].mxu0 %v596
    %v830 = vpop.f32.mrb[0].mxu0
    %v831 = vadd.f32 %v761, %v830
    %v832 = vpop.f32.mrb[0].mxu0
    %833 = vdwg.mxu0
    %834 = vmatprep.subr.mxu0 0.0
    %835 = vmatpush1.msra.mxu0 %v399
    %836 = vmatprep.subr.mxu0 0.0
    %837 = vmatpush1.msra.mxu0 %v400
    %838 = vmatprep.subr.mxu0 0.0
    %839 = vmatpush1.msra.mxu0 %v401
    %840 = vmatprep.subr.mxu0 0.0
    %841 = vmatpush1.msra.mxu0 %v402
    %842 = vmatprep.subr.mxu0 0.0
    %843 = vmatpush1.msra.mxu0 %v403
    %844 = vmatprep.subr.mxu0 0.0
    %845 = vmatpush1.msra.mxu0 %v404
    %846 = vmatprep.subr.mxu0 0.0
    %847 = vmatpush1.msra.mxu0 %v405
    %848 = vmatprep.subr.mxu0 0.0
    %849 = vmatpush1.msra.mxu0 %v406
    %850 = vmatprep.subr.mxu0 0.0
    %851 = vmatpush1.msra.mxu0 %v407
    %852 = vmatprep.subr.mxu0 0.0
    %853 = vmatpush1.msra.mxu0 %v408
    %854 = vmatprep.subr.mxu0 0.0
    %855 = vmatpush1.msra.mxu0 %v409
    %856 = vmatprep.subr.mxu0 0.0
    %857 = vmatpush1.msra.mxu0 %v410
    %858 = vmatprep.subr.mxu0 0.0
    %859 = vmatpush1.msra.mxu0 %v411
    %860 = vmatprep.subr.mxu0 0.0
    %861 = vmatpush1.msra.mxu0 %v412
    %862 = vmatprep.subr.mxu0 0.0
    %863 = vmatpush1.msra.mxu0 %v413
    %864 = vmatprep.subr.mxu0 0.0
    %865 = vmatpush1.msra.mxu0 %v414
    %866 = vmatprep.subr.mxu0 0.0
    %867 = vmatpush1.msra.mxu0 %v415
    %868 = vmatprep.subr.mxu0 0.0
    %869 = vmatpush1.msra.mxu0 %v416
    %870 = vmatprep.subr.mxu0 0.0
    %871 = vmatpush1.msra.mxu0 %v417
    %872 = vmatprep.subr.mxu0 0.0
    %873 = vmatpush1.msra.mxu0 %v418
    %874 = vmatprep.subr.mxu0 0.0
    %875 = vmatpush1.msra.mxu0 %v419
    %876 = vmatprep.subr.mxu0 0.0
    %877 = vmatpush1.msra.mxu0 %v420
    %878 = vmatprep.subr.mxu0 0.0
    %879 = vmatpush1.msra.mxu0 %v421
    %880 = vmatprep.subr.mxu0 0.0
    %881 = vmatpush1.msra.mxu0 %v422
    %882 = vmatprep.subr.mxu0 0.0
    %883 = vmatpush1.msra.mxu0 %v423
    %884 = vmatprep.subr.mxu0 0.0
    %885 = vmatpush1.msra.mxu0 %v424
    %886 = vmatprep.subr.mxu0 0.0
    %887 = vmatpush1.msra.mxu0 %v425
    %888 = vmatprep.subr.mxu0 0.0
    %889 = vmatpush1.msra.mxu0 %v426
    %890 = vmatprep.subr.mxu0 0.0
    %891 = vmatpush1.msra.mxu0 %v427
    %892 = vmatprep.subr.mxu0 0.0
    %893 = vmatpush1.msra.mxu0 %v428
    %894 = vmatprep.subr.mxu0 0.0
    %895 = vmatpush1.msra.mxu0 %v429
    %896 = vmatprep.subr.mxu0 0.0
    %897 = vmatpush1.msra.mxu0 %v430
    %898 = vmatprep.mubr.f32.mxu0 %v599
    %899 = vmatmul.mubr.f32.gmra.mrb[0].mxu0 %v598
    %v900 = vpop.f32.mrb[0].mxu0
    %v901 = vadd.f32 %v831, %v900
    %v902 = vpop.f32.mrb[0].mxu0
    %903 = vdwg.mxu0
    %904 = vmatprep.subr.mxu0 0.0
    %905 = vmatpush1.msra.mxu0 %v431
    %906 = vmatprep.subr.mxu0 0.0
    %907 = vmatpush1.msra.mxu0 %v432
    %908 = vmatprep.subr.mxu0 0.0
    %909 = vmatpush1.msra.mxu0 %v433
    %910 = vmatprep.subr.mxu0 0.0
    %911 = vmatpush1.msra.mxu0 %v434
    %912 = vmatprep.subr.mxu0 0.0
    %913 = vmatpush1.msra.mxu0 %v435
    %914 = vmatprep.subr.mxu0 0.0
    %915 = vmatpush1.msra.mxu0 %v436
    %916 = vmatprep.subr.mxu0 0.0
    %917 = vmatpush1.msra.mxu0 %v437
    %918 = vmatprep.subr.mxu0 0.0
    %919 = vmatpush1.msra.mxu0 %v438
    %920 = vmatprep.subr.mxu0 0.0
    %921 = vmatpush1.msra.mxu0 %v439
    %922 = vmatprep.subr.mxu0 0.0
    %923 = vmatpush1.msra.mxu0 %v440
    %924 = vmatprep.subr.mxu0 0.0
    %925 = vmatpush1.msra.mxu0 %v441
    %926 = vmatprep.subr.mxu0 0.0
    %927 = vmatpush1.msra.mxu0 %v442
    %928 = vmatprep.subr.mxu0 0.0
    %929 = vmatpush1.msra.mxu0 %v443
    %930 = vmatprep.subr.mxu0 0.0
    %931 = vmatpush1.msra.mxu0 %v444
    %932 = vmatprep.subr.mxu0 0.0
    %933 = vmatpush1.msra.mxu0 %v445
    %934 = vmatprep.subr.mxu0 0.0
    %935 = vmatpush1.msra.mxu0 %v446
    %936 = vmatprep.subr.mxu0 0.0
    %937 = vmatpush1.msra.mxu0 %v447
    %938 = vmatprep.subr.mxu0 0.0
    %939 = vmatpush1.msra.mxu0 %v448
    %940 = vmatprep.subr.mxu0 0.0
    %941 = vmatpush1.msra.mxu0 %v449
    %942 = vmatprep.subr.mxu0 0.0
    %943 = vmatpush1.msra.mxu0 %v450
    %944 = vmatprep.subr.mxu0 0.0
    %945 = vmatpush1.msra.mxu0 %v451
    %946 = vmatprep.subr.mxu0 0.0
    %947 = vmatpush1.msra.mxu0 %v452
    %948 = vmatprep.subr.mxu0 0.0
    %949 = vmatpush1.msra.mxu0 %v453
    %950 = vmatprep.subr.mxu0 0.0
    %951 = vmatpush1.msra.mxu0 %v454
    %952 = vmatprep.subr.mxu0 0.0
    %953 = vmatpush1.msra.mxu0 %v455
    %954 = vmatprep.subr.mxu0 0.0
    %955 = vmatpush1.msra.mxu0 %v456
    %956 = vmatprep.subr.mxu0 0.0
    %957 = vmatpush1.msra.mxu0 %v457
    %958 = vmatprep.subr.mxu0 0.0
    %959 = vmatpush1.msra.mxu0 %v458
    %960 = vmatprep.subr.mxu0 0.0
    %961 = vmatpush1.msra.mxu0 %v459
    %962 = vmatprep.subr.mxu0 0.0
    %963 = vmatpush1.msra.mxu0 %v460
    %964 = vmatprep.subr.mxu0 0.0
    %965 = vmatpush1.msra.mxu0 %v461
    %966 = vmatprep.subr.mxu0 0.0
    %967 = vmatpush1.msra.mxu0 %v462
    %968 = vmatprep.mubr.f32.mxu0 %v601
    %969 = vmatmul.mubr.f32.gmra.mrb[0].mxu0 %v600
    %v970 = vpop.f32.mrb[0].mxu0
    %v971 = vadd.f32 %v901, %v970
    %v972 = vpop.f32.mrb[0].mxu0
    %973 = vdwg.mxu0
    %974 = vmatprep.subr.mxu0 0.0
    %975 = vmatpush1.msra.mxu0 %v463
    %976 = vmatprep.subr.mxu0 0.0
    %977 = vmatpush1.msra.mxu0 %v464
    %978 = vmatprep.subr.mxu0 0.0
    %979 = vmatpush1.msra.mxu0 %v465
    %980 = vmatprep.subr.mxu0 0.0
    %981 = vmatpush1.msra.mxu0 %v466
    %982 = vmatprep.subr.mxu0 0.0
    %983 = vmatpush1.msra.mxu0 %v467
    %984 = vmatprep.subr.mxu0 0.0
    %985 = vmatpush1.msra.mxu0 %v468
    %986 = vmatprep.subr.mxu0 0.0
    %987 = vmatpush1.msra.mxu0 %v469
    %988 = vmatprep.subr.mxu0 0.0
    %989 = vmatpush1.msra.mxu0 %v470
    %990 = vmatprep.subr.mxu0 0.0
    %991 = vmatpush1.msra.mxu0 %v471
    %992 = vmatprep.subr.mxu0 0.0
    %993 = vmatpush1.msra.mxu0 %v472
    %994 = vmatprep.subr.mxu0 0.0
    %995 = vmatpush1.msra.mxu0 %v473
    %996 = vmatprep.subr.mxu0 0.0
    %997 = vmatpush1.msra.mxu0 %v474
    %998 = vmatprep.subr.mxu0 0.0
    %999 = vmatpush1.msra.mxu0 %v475
    %1000 = vmatprep.subr.mxu0 0.0
    %1001 = vmatpush1.msra.mxu0 %v476
    %1002 = vmatprep.subr.mxu0 0.0
    %1003 = vmatpush1.msra.mxu0 %v477
    %1004 = vmatprep.subr.mxu0 0.0
    %1005 = vmatpush1.msra.mxu0 %v478
    %1006 = vmatprep.subr.mxu0 0.0
    %1007 = vmatpush1.msra.mxu0 %v479
    %1008 = vmatprep.subr.mxu0 0.0
    %1009 = vmatpush1.msra.mxu0 %v480
    %1010 = vmatprep.subr.mxu0 0.0
    %1011 = vmatpush1.msra.mxu0 %v481
    %1012 = vmatprep.subr.mxu0 0.0
    %1013 = vmatpush1.msra.mxu0 %v482
    %1014 = vmatprep.subr.mxu0 0.0
    %1015 = vmatpush1.msra.mxu0 %v483
    %1016 = vmatprep.subr.mxu0 0.0
    %1017 = vmatpush1.msra.mxu0 %v484
    %1018 = vmatprep.subr.mxu0 0.0
    %1019 = vmatpush1.msra.mxu0 %v485
    %1020 = vmatprep.subr.mxu0 0.0
    %1021 = vmatpush1.msra.mxu0 %v486
    %1022 = vmatprep.subr.mxu0 0.0
    %1023 = vmatpush1.msra.mxu0 %v487
    %1024 = vmatprep.subr.mxu0 0.0
    %1025 = vmatpush1.msra.mxu0 %v488
    %1026 = vmatprep.subr.mxu0 0.0
    %1027 = vmatpush1.msra.mxu0 %v489
    %1028 = vmatprep.subr.mxu0 0.0
    %1029 = vmatpush1.msra.mxu0 %v490
    %1030 = vmatprep.subr.mxu0 0.0
    %1031 = vmatpush1.msra.mxu0 %v491
    %1032 = vmatprep.subr.mxu0 0.0
    %1033 = vmatpush1.msra.mxu0 %v492
    %1034 = vmatprep.subr.mxu0 0.0
    %1035 = vmatpush1.msra.mxu0 %v493
    %1036 = vmatprep.subr.mxu0 0.0
    %1037 = vmatpush1.msra.mxu0 %v494
    %1038 = vmatprep.mubr.f32.mxu0 %v603
    %1039 = vmatmul.mubr.f32.gmra.mrb[0].mxu0 %v602
    %v1040 = vpop.f32.mrb[0].mxu0
    %v1041 = vadd.f32 %v971, %v1040
    %v1042 = vpop.f32.mrb[0].mxu0
    %1043 = vdwg.mxu0
    %1044 = vmatprep.subr.mxu0 0.0
    %1045 = vmatpush1.msra.mxu0 %v495
    %1046 = vmatprep.subr.mxu0 0.0
    %1047 = vmatpush1.msra.mxu0 %v496
    %1048 = vmatprep.subr.mxu0 0.0
    %1049 = vmatpush1.msra.mxu0 %v497
    %1050 = vmatprep.subr.mxu0 0.0
    %1051 = vmatpush1.msra.mxu0 %v498
    %1052 = vmatprep.subr.mxu0 0.0
    %1053 = vmatpush1.msra.mxu0 %v499
    %1054 = vmatprep.subr.mxu0 0.0
    %1055 = vmatpush1.msra.mxu0 %v500
    %1056 = vmatprep.subr.mxu0 0.0
    %1057 = vmatpush1.msra.mxu0 %v501
    %1058 = vmatprep.subr.mxu0 0.0
    %1059 = vmatpush1.msra.mxu0 %v502
    %1060 = vmatprep.subr.mxu0 0.0
    %1061 = vmatpush1.msra.mxu0 %v503
    %1062 = vmatprep.subr.mxu0 0.0
    %1063 = vmatpush1.msra.mxu0 %v504
    %1064 = vmatprep.subr.mxu0 0.0
    %1065 = vmatpush1.msra.mxu0 %v505
    %1066 = vmatprep.subr.mxu0 0.0
    %1067 = vmatpush1.msra.mxu0 %v506
    %1068 = vmatprep.subr.mxu0 0.0
    %1069 = vmatpush1.msra.mxu0 %v507
    %1070 = vmatprep.subr.mxu0 0.0
    %1071 = vmatpush1.msra.mxu0 %v508
    %1072 = vmatprep.subr.mxu0 0.0
    %1073 = vmatpush1.msra.mxu0 %v509
    %1074 = vmatprep.subr.mxu0 0.0
    %1075 = vmatpush1.msra.mxu0 %v510
    %1076 = vmatprep.subr.mxu0 0.0
    %1077 = vmatpush1.msra.mxu0 %v511
    %1078 = vmatprep.subr.mxu0 0.0
    %1079 = vmatpush1.msra.mxu0 %v512
    %1080 = vmatprep.subr.mxu0 0.0
    %1081 = vmatpush1.msra.mxu0 %v513
    %1082 = vmatprep.subr.mxu0 0.0
    %1083 = vmatpush1.msra.mxu0 %v514
    %1084 = vmatprep.subr.mxu0 0.0
    %1085 = vmatpush1.msra.mxu0 %v515
    %1086 = vmatprep.subr.mxu0 0.0
    %1087 = vmatpush1.msra.mxu0 %v516
    %1088 = vmatprep.subr.mxu0 0.0
    %1089 = vmatpush1.msra.mxu0 %v517
    %1090 = vmatprep.subr.mxu0 0.0
    %1091 = vmatpush1.msra.mxu0 %v518
    %1092 = vmatprep.subr.mxu0 0.0
    %1093 = vmatpush1.msra.mxu0 %v519
    %1094 = vmatprep.subr.mxu0 0.0
    %1095 = vmatpush1.msra.mxu0 %v520
    %1096 = vmatprep.subr.mxu0 0.0
    %1097 = vmatpush1.msra.mxu0 %v521
    %1098 = vmatprep.subr.mxu0 0.0
    %1099 = vmatpush1.msra.mxu0 %v522
    %1100 = vmatprep.subr.mxu0 0.0
    %1101 = vmatpush1.msra.mxu0 %v523
    %1102 = vmatprep.subr.mxu0 0.0
    %1103 = vmatpush1.msra.mxu0 %v524
    %1104 = vmatprep.subr.mxu0 0.0
    %1105 = vmatpush1.msra.mxu0 %v525
    %1106 = vmatprep.subr.mxu0 0.0
    %1107 = vmatpush1.msra.mxu0 %v526
    %1108 = vmatprep.mubr.f32.mxu0 %v605
    %1109 = vmatmul.mubr.f32.gmra.mrb[0].mxu0 %v604
    %v1110 = vpop.f32.mrb[0].mxu0
    %v1111 = vadd.f32 %v1041, %v1110
    %v1112 = vpop.f32.mrb[0].mxu0
    %1113 = vdwg.mxu0
    %1114 = vmatprep.subr.mxu0 0.0
    %1115 = vmatpush1.msra.mxu0 %v527
    %1116 = vmatprep.subr.mxu0 0.0
    %1117 = vmatpush1.msra.mxu0 %v528
    %1118 = vmatprep.subr.mxu0 0.0
    %1119 = vmatpush1.msra.mxu0 %v529
    %1120 = vmatprep.subr.mxu0 0.0
    %1121 = vmatpush1.msra.mxu0 %v530
    %1122 = vmatprep.subr.mxu0 0.0
    %1123 = vmatpush1.msra.mxu0 %v531
    %1124 = vmatprep.subr.mxu0 0.0
    %1125 = vmatpush1.msra.mxu0 %v532
    %1126 = vmatprep.subr.mxu0 0.0
    %1127 = vmatpush1.msra.mxu0 %v533
    %1128 = vmatprep.subr.mxu0 0.0
    %1129 = vmatpush1.msra.mxu0 %v534
    %1130 = vmatprep.subr.mxu0 0.0
    %1131 = vmatpush1.msra.mxu0 %v535
    %1132 = vmatprep.subr.mxu0 0.0
    %1133 = vmatpush1.msra.mxu0 %v536
    %1134 = vmatprep.subr.mxu0 0.0
    %1135 = vmatpush1.msra.mxu0 %v537
    %1136 = vmatprep.subr.mxu0 0.0
    %1137 = vmatpush1.msra.mxu0 %v538
    %1138 = vmatprep.subr.mxu0 0.0
    %1139 = vmatpush1.msra.mxu0 %v539
    %1140 = vmatprep.subr.mxu0 0.0
    %1141 = vmatpush1.msra.mxu0 %v540
    %1142 = vmatprep.subr.mxu0 0.0
    %1143 = vmatpush1.msra.mxu0 %v541
    %1144 = vmatprep.subr.mxu0 0.0
    %1145 = vmatpush1.msra.mxu0 %v542
    %1146 = vmatprep.subr.mxu0 0.0
    %1147 = vmatpush1.msra.mxu0 %v543
    %1148 = vmatprep.subr.mxu0 0.0
    %1149 = vmatpush1.msra.mxu0 %v544
    %1150 = vmatprep.subr.mxu0 0.0
    %1151 = vmatpush1.msra.mxu0 %v545
    %1152 = vmatprep.subr.mxu0 0.0
    %1153 = vmatpush1.msra.mxu0 %v546
    %1154 = vmatprep.subr.mxu0 0.0
    %1155 = vmatpush1.msra.mxu0 %v547
    %1156 = vmatprep.subr.mxu0 0.0
    %1157 = vmatpush1.msra.mxu0 %v548
    %1158 = vmatprep.subr.mxu0 0.0
    %1159 = vmatpush1.msra.mxu0 %v549
    %1160 = vmatprep.subr.mxu0 0.0
    %1161 = vmatpush1.msra.mxu0 %v550
    %1162 = vmatprep.subr.mxu0 0.0
    %1163 = vmatpush1.msra.mxu0 %v551
    %1164 = vmatprep.subr.mxu0 0.0
    %1165 = vmatpush1.msra.mxu0 %v552
    %1166 = vmatprep.subr.mxu0 0.0
    %1167 = vmatpush1.msra.mxu0 %v553
    %1168 = vmatprep.subr.mxu0 0.0
    %1169 = vmatpush1.msra.mxu0 %v554
    %1170 = vmatprep.subr.mxu0 0.0
    %1171 = vmatpush1.msra.mxu0 %v555
    %1172 = vmatprep.subr.mxu0 0.0
    %1173 = vmatpush1.msra.mxu0 %v556
    %1174 = vmatprep.subr.mxu0 0.0
    %1175 = vmatpush1.msra.mxu0 %v557
    %1176 = vmatprep.subr.mxu0 0.0
    %1177 = vmatpush1.msra.mxu0 %v558
    %1178 = vmatprep.mubr.f32.mxu0 %v607
    %1179 = vmatmul.mubr.f32.gmra.mrb[0].mxu0 %v606
    %v1180 = vpop.f32.mrb[0].mxu0
    %v1181 = vadd.f32 %v1111, %v1180
    %v1182 = vpop.f32.mrb[0].mxu0
    %1183 = vdwg.mxu0
    %v1184 = vmul.f32 %v1181, 0.0625
    %v1185 = vld [vmem:[%s2] sm:$0x1]
    %v1187 = vlaneseq
    %v1188 = vshrl.u32 %v1187, 7
    %v1189 = vsub.s32 0, %v1188
    %v1190 = vrot.slane %v1185, %v1189
    %v1192 = vadd.f32 %v1184, %v1190
    %vm1193 = vcmask 197632
    %1194 = vst.msk [vmem:[#allocation2] sm:$0x3] %vm1193, %v1192
    // Predicated region
    $region14: #{tpu_custom_call.1} parent=1 // pred_check
      _
    $region15: #{tpu_custom_call.1} parent=1 // pred_check_branch
      %1196 = sbr.rel (0) target = $region17
    $region16: #{tpu_custom_call.1} parent=1 // pred_region
      %s1198 = ssub.s32 32, 32
      %1199 = vsyncadd [#allocation3], %s1198
      %s1201 = sshll.u32 [#allocation2], 4
      %s1202 = int_to_ptr.vmem [resolvable:$true] %s1201
      %1204 = dma.vmem_to_hbm [thread:$0]  %s1202, 32, %s3, [#allocation3]
    $region17: #{tpu_custom_call.1} parent=1 // pred_fallthru
      _
    // Predicated region
    $region18: #{tpu_custom_call.1} parent=1 // pred_check
      _
    $region19: #{tpu_custom_call.1} parent=1 // pred_check_branch
      %1206 = sbr.rel (0) target = $region21
    $region20: #{tpu_custom_call.1} parent=1 // pred_region
      %1207 = dma.done [#allocation3], 32
    $region21: #{tpu_custom_call.1} parent=1 // pred_fallthru
      _
    %1208 = vsyncpa [#allocation3], 1

</llo_original>
